<compile_context>
chip_gen: v6e
topology: v6e:2x2x1
jax: 0.10.0
libtpu: 0.0.40
codegen_flags: <defaults>
</compile_context>

<pallas_src>
import functools

import jax
import jax.numpy as jnp
from jax.experimental import pallas as pl
from jax.experimental.pallas import tpu as pltpu


# --------------------------------------------------------------------------
# Pallas kernel: masked cross-entropy partial reduction over pixel tiles
# --------------------------------------------------------------------------
def _ce_sum_kernel(x_ref, t_ref, sum_ref, cnt_ref, acc_sum, acc_cnt,
                   *, ignore_index, hw, tile_p):
    b = pl.program_id(0)          # batch index
    j = pl.program_id(1)          # pixel-tile index

    @pl.when(jnp.logical_and(b == 0, j == 0))
    def _():
        acc_sum[...] = jnp.zeros_like(acc_sum)
        acc_cnt[...] = jnp.zeros_like(acc_cnt)

    x = x_ref[...].astype(jnp.float32)       # (C, TP) logits, class-major
    t = t_ref[...]                           # (1, TP) int32 targets

    # stable log-sum-exp along the class (sublane) axis
    m = jnp.max(x, axis=0, keepdims=True)                          # (1, TP)
    lse = jnp.log(jnp.sum(jnp.exp(x - m), axis=0, keepdims=True)) + m

    # gather the target-class logit via one-hot compare (no dynamic gather)
    cls = jax.lax.broadcasted_iota(jnp.int32, x.shape, 0)           # (C, TP)
    picked = jnp.sum(jnp.where(cls == t, x, 0.0), axis=0, keepdims=True)

    # validity: not ignore_index AND inside the (possibly ragged) pixel range
    pix = j * tile_p + jax.lax.broadcasted_iota(jnp.int32, t.shape, 1)
    valid = jnp.logical_and(t != ignore_index, pix < hw)            # (1, TP)

    # lane-dense per-lane partial accumulation in VMEM scratch
    acc_sum[...] += jnp.where(valid, lse - picked, 0.0)             # -log p_t
    acc_cnt[...] += jnp.where(valid, 1.0, 0.0)

    # write the reduced scalars exactly once, at the final grid step
    @pl.when(jnp.logical_and(b == pl.num_programs(0) - 1,
                             j == pl.num_programs(1) - 1))
    def _():
        sum_ref[...] = jnp.sum(acc_sum[...], keepdims=True)
        cnt_ref[...] = jnp.sum(acc_cnt[...], keepdims=True)


# --------------------------------------------------------------------------
# Glue: optional align_corners bilinear resize (only when spatial dims differ)
# --------------------------------------------------------------------------
def _bilinear_align_corners(x, out_h, out_w):
    # x: (n, c, H, W) -> (n, c, out_h, out_w), PyTorch align_corners=True
    _, _, H, W = x.shape

    def coords(out, inp):
        if out == 1:
            return jnp.zeros((1,), jnp.float32)
        return jnp.arange(out, dtype=jnp.float32) * ((inp - 1) / (out - 1))

    yc = coords(out_h, H)
    xc = coords(out_w, W)
    y0 = jnp.floor(yc).astype(jnp.int32)
    y1 = jnp.minimum(y0 + 1, H - 1)
    wy = (yc - y0.astype(jnp.float32))[:, None]                     # (out_h, 1)
    x0 = jnp.floor(xc).astype(jnp.int32)
    x1 = jnp.minimum(x0 + 1, W - 1)
    wx = xc - x0.astype(jnp.float32)                                # (out_w,)

    top = x[:, :, y0, :][..., x0] * (1.0 - wx) + x[:, :, y0, :][..., x1] * wx
    bot = x[:, :, y1, :][..., x0] * (1.0 - wx) + x[:, :, y1, :][..., x1] * wx
    return top * (1.0 - wy) + bot * wy


# --------------------------------------------------------------------------
# FocalLoss forward
# --------------------------------------------------------------------------
def focal_loss(logits, target, *, alpha=1.0, gamma=1.5, size_average=True,
               ignore_index=250, tile_p_max=2048):
    n, c, w, h = logits.shape
    nt, wt, ht = target.shape
    if (h != ht) or (w != wt):
        # F.interpolate(input, size=(ht, wt), mode='bilinear', align_corners=True)
        logits = _bilinear_align_corners(logits, ht, wt)

    n2, c2, H2, W2 = logits.shape
    hw = H2 * W2

    # FREE reshapes only: keep class-major layout, keep HBM dtype.
    x = logits.reshape(n2, c2, hw)
    t = target.reshape(nt, 1, wt * ht).astype(jnp.int32)

    # Pick the largest lane-dense pixel tile that keeps the logits block small
    # relative to VMEM (double-buffered by the pipeline).
    itemsize = logits.dtype.itemsize
    vmem_budget = 8 * 1024 * 1024                       # per logits block
    tp_cap = max(128, (vmem_budget // (c2 * itemsize)) // 128 * 128)
    tp_cap = min(tp_cap, tile_p_max)
    tile_p = hw if hw <= tp_cap else tp_cap             # full dim or mult of 128
    num_j = pl.cdiv(hw, tile_p)

    kernel = functools.partial(_ce_sum_kernel, ignore_index=ignore_index,
                               hw=hw, tile_p=tile_p)

    # TODO(synk): on v7x, shard the pixel grid over the 2 TensorCores with
    # per-core partial outputs; this single-TC reduction is fine for v5e/v6e.
    sum_loss, cnt = pl.pallas_call(
        kernel,
        out_shape=(jax.ShapeDtypeStruct((1, 1), jnp.float32),
                   jax.ShapeDtypeStruct((1, 1), jnp.float32)),
        grid=(n2, num_j),
        in_specs=[pl.BlockSpec((None, c2, tile_p), lambda b, j: (b, 0, j)),
                  pl.BlockSpec((None, 1, tile_p), lambda b, j: (b, 0, j))],
        out_specs=(pl.BlockSpec((1, 1), lambda b, j: (0, 0)),
                   pl.BlockSpec((1, 1), lambda b, j: (0, 0))),
        scratch_shapes=[pltpu.VMEM((1, tile_p), jnp.float32),
                        pltpu.VMEM((1, tile_p), jnp.float32)],
        compiler_params=pltpu.CompilerParams(
            dimension_semantics=("arbitrary", "arbitrary")),
        cost_estimate=pl.CostEstimate(
            flops=6 * n2 * hw * c2,
            transcendentals=n2 * hw * (c2 + 1),
            bytes_accessed=n2 * hw * c2 * itemsize + n2 * hw * 4 + 8),
    )(x, t)

    if size_average:
        # F.cross_entropy(..., size_average=True) == mean over valid pixels
        ce = sum_loss[0, 0] / cnt[0, 0]
    else:
        # size_average=False == reduction='sum'
        ce = sum_loss[0, 0]

    pt = jnp.exp(-ce)
    focal = alpha * (1.0 - pt) ** gamma * ce
    # .mean() / .sum() of a scalar is the scalar itself
    return focal


# --------------------------------------------------------------------------
if __name__ == "__main__":
    key = jax.random.PRNGKey(0)
    k1, k2 = jax.random.split(key)

    n, c, w, h = 2, 4, 16, 16
    logits = jax.random.normal(k1, (n, c, w, h), dtype=jnp.float32)
    target = jax.random.randint(k2, (n, w, h), 0, c, dtype=jnp.int32)

    out = focal_loss(logits, target, alpha=1.0, gamma=1.5,
                     size_average=True, ignore_index=250)
    jax.block_until_ready(out)
    print("KERNEL_OK")
</pallas_src>

<mosaic_0001>
module attributes {stable_mosaic.version = 11 : i64} {
  func.func @_ce_sum_kernel(%arg0: i32, %arg1: i32, %arg2: memref<1x4x256xf32, #tpu.memory_space<vmem>>, %arg3: memref<1x1x256xi32, #tpu.memory_space<vmem>>, %arg4: memref<1x1xf32, #tpu.memory_space<vmem>>, %arg5: memref<1x1xf32, #tpu.memory_space<vmem>>, %arg6: memref<1x256xf32, #tpu.memory_space<vmem>>, %arg7: memref<1x256xf32, #tpu.memory_space<vmem>>) attributes {dimension_semantics = [#tpu.dimension_semantics<arbitrary>, #tpu.dimension_semantics<arbitrary>], iteration_bounds = array<i64: 2, 1>, scalar_prefetch = 0 : i64, scratch_operands = 2 : i64, tpu.core_type = #tpu.core_type<tc>, window_params = [{transform_indices = @transform_0, window_bounds = array<i64: 1, 4, 256>}, {transform_indices = @transform_1, window_bounds = array<i64: 1, 1, 256>}, {pipeline_mode = #tpu.pipeline_mode<synchronous>, transform_indices = @transform_2, window_bounds = array<i64: 1, 1>}, {pipeline_mode = #tpu.pipeline_mode<synchronous>, transform_indices = @transform_3, window_bounds = array<i64: 1, 1>}]} {
    %c0_i32 = arith.constant 0 : i32
    %0 = arith.cmpi eq, %arg0, %c0_i32 : i32
    %c0_i32_0 = arith.constant 0 : i32
    %1 = arith.cmpi eq, %arg1, %c0_i32_0 : i32
    %2 = arith.andi %0, %1 : i1
    %3 = arith.extui %2 : i1 to i32
    %c0_i32_1 = arith.constant 0 : i32
    %4 = arith.cmpi ne, %3, %c0_i32_1 : i32
    scf.if %4 {
      %cst_24 = arith.constant 0.000000e+00 : f32
      %51 = vector.broadcast %cst_24 : f32 to vector<1x256xf32>
      %c0_25 = arith.constant 0 : index
      %c0_26 = arith.constant 0 : index
      %52 = vector.load %arg6[%c0_25, %c0_26] : memref<1x256xf32, #tpu.memory_space<vmem>>, vector<1x256xf32>
      tpu.vector_store %arg6[%c0_25, %c0_26], %51 {strides = array<i32>} : memref<1x256xf32, #tpu.memory_space<vmem>>, vector<1x256xf32>,
      %cst_27 = arith.constant 0.000000e+00 : f32
      %53 = vector.broadcast %cst_27 : f32 to vector<1x256xf32>
      %c0_28 = arith.constant 0 : index
      %c0_29 = arith.constant 0 : index
      %54 = vector.load %arg7[%c0_28, %c0_29] : memref<1x256xf32, #tpu.memory_space<vmem>>, vector<1x256xf32>
      tpu.vector_store %arg7[%c0_28, %c0_29], %53 {strides = array<i32>} : memref<1x256xf32, #tpu.memory_space<vmem>>, vector<1x256xf32>,
    } else {
    }
    %c0 = arith.constant 0 : index
    %c0_2 = arith.constant 0 : index
    %c0_3 = arith.constant 0 : index
    %5 = vector.load %arg2[%c0, %c0_2, %c0_3] : memref<1x4x256xf32, #tpu.memory_space<vmem>>, vector<1x4x256xf32>
    %6 = vector.shape_cast %5 : vector<1x4x256xf32> to vector<4x256xf32>
    %c0_4 = arith.constant 0 : index
    %c0_5 = arith.constant 0 : index
    %c0_6 = arith.constant 0 : index
    %7 = vector.load %arg3[%c0_4, %c0_5, %c0_6] : memref<1x1x256xi32, #tpu.memory_space<vmem>>, vector<1x1x256xi32>
    %8 = vector.shape_cast %7 : vector<1x1x256xi32> to vector<1x256xi32>
    %cst = arith.constant dense<0xFF800000> : vector<256xf32>
    %9 = vector.multi_reduction <maximumf>, %6, %cst [0] : vector<4x256xf32> to vector<256xf32>
    %10 = vector.shape_cast %9 : vector<256xf32> to vector<1x256xf32>
    %11 = vector.broadcast %10 : vector<1x256xf32> to vector<4x256xf32>
    %12 = arith.subf %6, %11 : vector<4x256xf32>
    %13 = math.exp %12 : vector<4x256xf32>
    %cst_7 = arith.constant dense<0.000000e+00> : vector<256xf32>
    %14 = vector.multi_reduction <add>, %13, %cst_7 [0] : vector<4x256xf32> to vector<256xf32>
    %15 = vector.shape_cast %14 : vector<256xf32> to vector<1x256xf32>
    %16 = math.log %15 : vector<1x256xf32>
    %17 = arith.addf %16, %10 : vector<1x256xf32>
    %18 = tpu.iota {dimensions = array<i32: 0>} : vector<4x256xi32>
    %19 = vector.broadcast %8 : vector<1x256xi32> to vector<4x256xi32>
    %20 = arith.cmpi eq, %18, %19 : vector<4x256xi32>
    %cst_8 = arith.constant 0.000000e+00 : f32
    %21 = vector.broadcast %cst_8 : f32 to vector<4x256xf32>
    %22 = arith.select %20, %6, %21 : vector<4x256xi1>, vector<4x256xf32>
    %cst_9 = arith.constant dense<0.000000e+00> : vector<256xf32>
    %23 = vector.multi_reduction <add>, %22, %cst_9 [0] : vector<4x256xf32> to vector<256xf32>
    %24 = vector.shape_cast %23 : vector<256xf32> to vector<1x256xf32>
    %c256_i32 = arith.constant 256 : i32
    %25 = arith.muli %arg1, %c256_i32 : i32
    %26 = tpu.iota {dimensions = array<i32: 1>} : vector<1x256xi32>
    %27 = vector.broadcast %25 : i32 to vector<1x256xi32>
    %28 = arith.addi %27, %26 : vector<1x256xi32>
    %c250_i32 = arith.constant 250 : i32
    %29 = vector.broadcast %c250_i32 : i32 to vector<1x256xi32>
    %30 = arith.cmpi ne, %8, %29 : vector<1x256xi32>
    %c256_i32_10 = arith.constant 256 : i32
    %31 = vector.broadcast %c256_i32_10 : i32 to vector<1x256xi32>
    %32 = arith.cmpi slt, %28, %31 : vector<1x256xi32>
    %33 = arith.andi %30, %32 : vector<1x256xi1>
    %c0_11 = arith.constant 0 : index
    %c0_12 = arith.constant 0 : index
    %34 = vector.load %arg6[%c0_11, %c0_12] : memref<1x256xf32, #tpu.memory_space<vmem>>, vector<1x256xf32>
    %35 = arith.subf %17, %24 : vector<1x256xf32>
    %cst_13 = arith.constant 0.000000e+00 : f32
    %36 = vector.broadcast %cst_13 : f32 to vector<1x256xf32>
    %37 = arith.select %33, %35, %36 : vector<1x256xi1>, vector<1x256xf32>
    %38 = arith.addf %34, %37 : vector<1x256xf32>
    %c0_14 = arith.constant 0 : index
    %c0_15 = arith.constant 0 : index
    %39 = vector.load %arg6[%c0_14, %c0_15] : memref<1x256xf32, #tpu.memory_space<vmem>>, vector<1x256xf32>
    tpu.vector_store %arg6[%c0_14, %c0_15], %38 {strides = array<i32>} : memref<1x256xf32, #tpu.memory_space<vmem>>, vector<1x256xf32>,
    %c0_16 = arith.constant 0 : index
    %c0_17 = arith.constant 0 : index
    %40 = vector.load %arg7[%c0_16, %c0_17] : memref<1x256xf32, #tpu.memory_space<vmem>>, vector<1x256xf32>
    %cst_18 = arith.constant 1.000000e+00 : f32
    %cst_19 = arith.constant 0.000000e+00 : f32
    %41 = vector.broadcast %cst_18 : f32 to vector<1x256xf32>
    %42 = vector.broadcast %cst_19 : f32 to vector<1x256xf32>
    %43 = arith.select %33, %41, %42 : vector<1x256xi1>, vector<1x256xf32>
    %44 = arith.addf %40, %43 : vector<1x256xf32>
    %c0_20 = arith.constant 0 : index
    %c0_21 = arith.constant 0 : index
    %45 = vector.load %arg7[%c0_20, %c0_21] : memref<1x256xf32, #tpu.memory_space<vmem>>, vector<1x256xf32>
    tpu.vector_store %arg7[%c0_20, %c0_21], %44 {strides = array<i32>} : memref<1x256xf32, #tpu.memory_space<vmem>>, vector<1x256xf32>,
    %c1_i32 = arith.constant 1 : i32
    %46 = arith.cmpi eq, %arg0, %c1_i32 : i32
    %c0_i32_22 = arith.constant 0 : i32
    %47 = arith.cmpi eq, %arg1, %c0_i32_22 : i32
    %48 = arith.andi %46, %47 : i1
    %49 = arith.extui %48 : i1 to i32
    %c0_i32_23 = arith.constant 0 : i32
    %50 = arith.cmpi ne, %49, %c0_i32_23 : i32
    scf.if %50 {
      %c0_24 = arith.constant 0 : index
      %c0_25 = arith.constant 0 : index
      %51 = vector.load %arg6[%c0_24, %c0_25] : memref<1x256xf32, #tpu.memory_space<vmem>>, vector<1x256xf32>
      %52 = vector.shape_cast %51 : vector<1x256xf32> to vector<1x1x256xf32>
      %cst_26 = arith.constant dense<0.000000e+00> : vector<1xf32>
      %53 = vector.multi_reduction <add>, %52, %cst_26 [1, 2] : vector<1x1x256xf32> to vector<1xf32>
      %54 = vector.shape_cast %53 : vector<1xf32> to vector<1x1x1xf32>
      %55 = vector.extract %54[0, 0, 0] : f32 from vector<1x1x1xf32>
      %56 = vector.broadcast %55 : f32 to vector<1x1xf32>
      %c0_27 = arith.constant 0 : index
      %c0_28 = arith.constant 0 : index
      %57 = vector.load %arg4[%c0_27, %c0_28] : memref<1x1xf32, #tpu.memory_space<vmem>>, vector<1x1xf32>
      tpu.vector_store %arg4[%c0_27, %c0_28], %56 {strides = array<i32>} : memref<1x1xf32, #tpu.memory_space<vmem>>, vector<1x1xf32>,
      %c0_29 = arith.constant 0 : index
      %c0_30 = arith.constant 0 : index
      %58 = vector.load %arg7[%c0_29, %c0_30] : memref<1x256xf32, #tpu.memory_space<vmem>>, vector<1x256xf32>
      %59 = vector.shape_cast %58 : vector<1x256xf32> to vector<1x1x256xf32>
      %cst_31 = arith.constant dense<0.000000e+00> : vector<1xf32>
      %60 = vector.multi_reduction <add>, %59, %cst_31 [1, 2] : vector<1x1x256xf32> to vector<1xf32>
      %61 = vector.shape_cast %60 : vector<1xf32> to vector<1x1x1xf32>
      %62 = vector.extract %61[0, 0, 0] : f32 from vector<1x1x1xf32>
      %63 = vector.broadcast %62 : f32 to vector<1x1xf32>
      %c0_32 = arith.constant 0 : index
      %c0_33 = arith.constant 0 : index
      %64 = vector.load %arg5[%c0_32, %c0_33] : memref<1x1xf32, #tpu.memory_space<vmem>>, vector<1x1xf32>
      tpu.vector_store %arg5[%c0_32, %c0_33], %63 {strides = array<i32>} : memref<1x1xf32, #tpu.memory_space<vmem>>, vector<1x1xf32>,
    } else {
    }
    return
  }
  func.func @transform_0(%arg0: i32, %arg1: i32) -> (i32, i32, i32) {
    %c0_i32 = arith.constant 0 : i32
    %c0_i32_0 = arith.constant 0 : i32
    return %arg0, %c0_i32, %arg1 : i32, i32, i32
  }
  func.func @transform_1(%arg0: i32, %arg1: i32) -> (i32, i32, i32) {
    %c0_i32 = arith.constant 0 : i32
    %c0_i32_0 = arith.constant 0 : i32
    return %arg0, %c0_i32, %arg1 : i32, i32, i32
  }
  func.func @transform_2(%arg0: i32, %arg1: i32) -> (i32, i32) {
    %c0_i32 = arith.constant 0 : i32
    %c0_i32_0 = arith.constant 0 : i32
    %c0_i32_1 = arith.constant 0 : i32
    return %c0_i32, %c0_i32_0 : i32, i32
  }
  func.func @transform_3(%arg0: i32, %arg1: i32) -> (i32, i32) {
    %c0_i32 = arith.constant 0 : i32
    %c0_i32_0 = arith.constant 0 : i32
    %c0_i32_1 = arith.constant 0 : i32
    return %c0_i32, %c0_i32_0 : i32, i32
  }
}

</mosaic_0001>

<llo_original>
// kernel: tpu_custom_call.1
$region0: #{tpu_custom_call.1}
  #allocation0 [shape = 'u32[]', space=smem, size = 0x4, offset = 0x4, fixed_abs, tag = 'smem constant byte address 0x4 - core index']
  #allocation1 [shape = 'u32[144,128]{1,0:T(1,128)}', space=vmem, size = 0x12000, scoped, tag = 'internal scratch']
  #allocation2 [shape = 'f32[1,256]{1,0:T(1,128)}', space=vmem, size = 0x400, scoped, tag = 'scratch operand']
  #allocation3 [shape = 'f32[1,256]{1,0:T(1,128)}', space=vmem, size = 0x400, scoped, tag = 'scratch operand']
  %s0 = inlined_call_operand.hbm [shape: f32[2,4,256], index: 0, kind: input, shape index: {}]
  %s1 = inlined_call_operand.hbm [shape: s32[2,1,256], index: 1, kind: input, shape index: {}]
  %s2 = inlined_call_operand.hbm [shape: f32[1,1], index: 2, kind: output, shape index: {0}]
  %s3 = inlined_call_operand.hbm [shape: f32[1,1], index: 3, kind: output, shape index: {1}]
  %4 = xla_tuple %s2, %s3
  %s5 = sld [smem:[#allocation0]]
  $region65: #{tpu_custom_call.1} parent=0
    _
  %s7 = ssub.s32 1, %s5
  %s8 = scalar_select 0, %s7, %s5
  $region1: #{tpu_custom_call.1} parent=0
    #allocation4 [shape = 'u8[8192]{0}', space=vmem, size = 0x2000, scoped, tag = 'input window, operand 0']
    #allocation5 [shape = 's32[2]{0}', space=sflag, size = 0x8, scoped, tag = 'scoped memory for tpu_custom_call.1']
    #allocation6 [shape = 's32[2]{0}', space=sflag, size = 0x8, scoped, tag = 'scoped memory for tpu_custom_call.1']
    #allocation7 [shape = 'u8[2048]{0}', space=vmem, size = 0x800, scoped, tag = 'input window, operand 1']
    #allocation8 [shape = 's32[2]{0}', space=sflag, size = 0x8, scoped, tag = 'scoped memory for tpu_custom_call.1']
    #allocation9 [shape = 'u8[512]{0}', space=vmem, size = 0x400, scoped, tag = 'output window, operand 0, single buffered']
    #allocation10 [shape = 'u8[512]{0}', space=vmem, size = 0x400, scoped, tag = 'output window, operand 1, single buffered']
    #allocation11 [shape = 's32[1]{0}', space=sflag, size = 0x4, scoped, tag = 'scoped memory for tpu_custom_call.1']
    %9 = vsyncpa [#allocation5], 0
    %s10 = scalar_lea.sflag [#allocation5], 1
    %11 = vsyncpa %s10, 0
    %12 = vsyncpa [#allocation8], 0
    %s13 = scalar_lea.sflag [#allocation8], 1
    %14 = vsyncpa %s13, 0
    %15 = vsyncpa [#allocation6], 0
    %16 = vsyncpa [#allocation11], 0
    loop: start=0, step=1, limit=4
    $region2: #{tpu_custom_call.1} parent=1 // loop_pre_header
      _
    $region3: #{tpu_custom_call.1} parent=1 // loop_header
      %s18 = sphi 0, %s22
      %p19 = scmp.ge.s32.totalorder %s18, 4
      %s25 = sphi 0, %s37
      %s26 = sphi 0, %s33
      %s27 = sphi 0, %s25
      %s28 = sphi 0, %s26
      %s29 = sphi 0, %s27
      %s30 = sphi 0, %s28
      %s42 = sphi 0, %s44
      %s45 = sphi 0, %s42
      %s46 = sphi 0, %s45
      %s62 = sphi 0, %s46
      %s70 = sphi 0, %s72
      %s73 = sphi 0, %s70
      %s74 = sphi 0, %s73
      %s90 = sphi 0, %s74
      %s94 = sphi 0, %s94
      %s96 = sphi 0, %s94
      %s97 = sphi 0, %s96
      %s111 = sphi 0, %s97
      %s115 = sphi 0, %s115
      %s117 = sphi 0, %s115
      %s118 = sphi 0, %s117
      %s132 = sphi 0, %s118
    $region4: #{tpu_custom_call.1} parent=1 // loop_header_branch
      %21 = sbr.rel (%p19) target = $region8
    $region5: #{tpu_custom_call.1} parent=1 // loop_body
      %s23 = ssub.s32 %s18, 1
      %s24 = ssub.s32 %s18, 2
      %s31 = sadd.s32 1, %s26
      %p32 = scmp.ge.s32.totalorder %s31, 1
      %s33 = scalar_select %p32, 0, %s31
      %s34 = sadd.s32 1, %s25
      %s35 = scalar_select %p32, %s34, %s25
      %p36 = scmp.ge.s32.totalorder %s35, 2
      %s37 = scalar_select %p36, 0, %s35
      %s38 = ssub.s32 %s25, %s37
      %s39 = ssub.s32 %s26, %s33
      %s40 = sor.u32 %s38, %s39
      %p41 = scmp.eq.s32.totalorder %s40, 0
      %s43 = sadd.s32 %s42, 1
      %s44 = scalar_select %p41, %s42, %s43
      %p47 = pneg %p41
      %p48 = scmp.eq.s32.totalorder %s18, 1
      %p49 = por %p47, %p48
      %p50 = scmp.ne.s32.totalorder %s42, %s45
      %p51 = scmp.eq.s32.totalorder %s18, 0
      %p52 = por %p50, %p51
      %p53 = scmp.ne.s32.totalorder %s42, %s45
      %p54 = scmp.eq.s32.totalorder %s23, 1
      %p55 = por %p53, %p54
      %p56 = scmp.ne.s32.totalorder %s45, %s46
      %p57 = scmp.eq.s32.totalorder %s23, 0
      %p58 = por %p56, %p57
      %p59 = scmp.ne.s32.totalorder %s45, %s46
      %p60 = scmp.eq.s32.totalorder %s24, 1
      %p61 = por %p59, %p60
      %p63 = scmp.ne.s32.totalorder %s46, %s62
      %p64 = scmp.eq.s32.totalorder %s24, 0
      %p65 = por %p63, %p64
      %s66 = ssub.s32 %s25, %s37
      %s67 = ssub.s32 %s26, %s33
      %s68 = sor.u32 %s66, %s67
      %p69 = scmp.eq.s32.totalorder %s68, 0
      %s71 = sadd.s32 %s70, 1
      %s72 = scalar_select %p69, %s70, %s71
      %p75 = pneg %p69
      %p76 = scmp.eq.s32.totalorder %s18, 1
      %p77 = por %p75, %p76
      %p78 = scmp.ne.s32.totalorder %s70, %s73
      %p79 = scmp.eq.s32.totalorder %s18, 0
      %p80 = por %p78, %p79
      %p81 = scmp.ne.s32.totalorder %s70, %s73
      %p82 = scmp.eq.s32.totalorder %s23, 1
      %p83 = por %p81, %p82
      %p84 = scmp.ne.s32.totalorder %s73, %s74
      %p85 = scmp.eq.s32.totalorder %s23, 0
      %p86 = por %p84, %p85
      %p87 = scmp.ne.s32.totalorder %s73, %s74
      %p88 = scmp.eq.s32.totalorder %s24, 1
      %p89 = por %p87, %p88
      %p91 = scmp.ne.s32.totalorder %s74, %s90
      %p92 = scmp.eq.s32.totalorder %s24, 0
      %p93 = por %p91, %p92
      %s95 = sadd.s32 %s94, 1
      %p98 = scmp.eq.s32.totalorder %s18, 1
      %p99 = scmp.ne.s32.totalorder %s94, %s96
      %p100 = scmp.eq.s32.totalorder %s18, 0
      %p101 = por %p99, %p100
      %p102 = scmp.ne.s32.totalorder %s94, %s96
      %p103 = scmp.eq.s32.totalorder %s23, 1
      %p104 = por %p102, %p103
      %p105 = scmp.ne.s32.totalorder %s96, %s97
      %p106 = scmp.eq.s32.totalorder %s23, 0
      %p107 = por %p105, %p106
      %p108 = scmp.ne.s32.totalorder %s96, %s97
      %p109 = scmp.eq.s32.totalorder %s24, 1
      %p110 = por %p108, %p109
      %p112 = scmp.ne.s32.totalorder %s97, %s111
      %p113 = scmp.eq.s32.totalorder %s24, 0
      %p114 = por %p112, %p113
      %s116 = sadd.s32 %s115, 1
      %p119 = scmp.eq.s32.totalorder %s18, 1
      %p120 = scmp.ne.s32.totalorder %s115, %s117
      %p121 = scmp.eq.s32.totalorder %s18, 0
      %p122 = por %p120, %p121
      %p123 = scmp.ne.s32.totalorder %s115, %s117
      %p124 = scmp.eq.s32.totalorder %s23, 1
      %p125 = por %p123, %p124
      %p126 = scmp.ne.s32.totalorder %s117, %s118
      %p127 = scmp.eq.s32.totalorder %s23, 0
      %p128 = por %p126, %p127
      %p129 = scmp.ne.s32.totalorder %s117, %s118
      %p130 = scmp.eq.s32.totalorder %s24, 1
      %p131 = por %p129, %p130
      %p133 = scmp.ne.s32.totalorder %s118, %s132
      %p134 = scmp.eq.s32.totalorder %s24, 0
      %p135 = por %p133, %p134
      %p136 = scmp.le.s32.totalorder 1, %s18
      %p137 = scmp.lt.s32.totalorder %s18, 3
      %p138 = pnand %p136, %p137
      %p139 = pneg %p138
      // Predicated region
      $region9: #{tpu_custom_call.1} parent=5 // pred_check
        _
      $region10: #{tpu_custom_call.1} parent=5 // pred_check_branch
        %141 = sbr.rel (%p138) target = $region12
      $region11: #{tpu_custom_call.1} parent=5 // pred_region
        %s142 = ssub.s32 %s18, 1
      $region12: #{tpu_custom_call.1} parent=5 // pred_fallthru
        _
      %p143 = scmp.lt.s32.totalorder %s18, 2
      // Predicated region
      $region13: #{tpu_custom_call.1} parent=5 // pred_check
        %p144 = pneg %p143
      $region14: #{tpu_custom_call.1} parent=5 // pred_check_branch
        %146 = sbr.rel (%p144) target = $region16
      $region15: #{tpu_custom_call.1} parent=5 // pred_region
        // Predicated region
        $region17: #{tpu_custom_call.1} parent=15 // pred_check
          %p147 = pneg %p52
        $region18: #{tpu_custom_call.1} parent=15 // pred_check_branch
          %149 = sbr.rel (%p147) target = $region20
        $region19: #{tpu_custom_call.1} parent=15 // pred_region
          %s150 = sand.u32 %s42, 1
          %s151 = scalar_lea.sflag [#allocation5], %s150
          %s152 = sand.u32 %s42, 1
          %s153 = smul.addr %s152, 8
          %s154 = scalar_lea.vmem [#allocation4], %s153
          %s155 = smul.u32 2, %s26
          %s157 = ssub.s32 128, 128
          %158 = vsyncadd %s151, %s157
          %s159 = smul.addr %s25, 2
          %s160 = sadd.s32 %s155, %s159
          %s161 = smul.addr %s160, 64
          %s162 = scalar_lea.hbm %s0, %s161
          %s164 = sshll.u32 %s154, 4
          %s165 = int_to_ptr.vmem [resolvable:$true] %s164
          %167 = dma.hbm_to_vmem [thread:$0]  %s162, 128, %s165, %s151
        $region20: #{tpu_custom_call.1} parent=15 // pred_fallthru
          _
        // Predicated region
        $region21: #{tpu_custom_call.1} parent=15 // pred_check
          %p168 = pneg %p80
        $region22: #{tpu_custom_call.1} parent=15 // pred_check_branch
          %170 = sbr.rel (%p168) target = $region24
        $region23: #{tpu_custom_call.1} parent=15 // pred_region
          %s171 = sand.u32 %s70, 1
          %s172 = scalar_lea.sflag [#allocation8], %s171
          %s173 = sand.u32 %s70, 1
          %s174 = smul.addr %s173, 2
          %s175 = scalar_lea.vmem [#allocation7], %s174
          %s176 = smul.u32 2, %s26
          %s178 = ssub.s32 32, 32
          %179 = vsyncadd %s172, %s178
          %s180 = smul.addr %s25, 2
          %s181 = sadd.s32 %s176, %s180
          %s182 = smul.addr %s181, 16
          %s183 = scalar_lea.hbm %s1, %s182
          %s185 = sshll.u32 %s175, 4
          %s186 = int_to_ptr.vmem [resolvable:$true] %s185
          %188 = dma.hbm_to_vmem [thread:$0]  %s183, 32, %s186, %s172
        $region24: #{tpu_custom_call.1} parent=15 // pred_fallthru
          _
      $region16: #{tpu_custom_call.1} parent=5 // pred_fallthru
        _
      %p189 = scmp.le.s32.totalorder 1, %s18
      %p190 = scmp.lt.s32.totalorder %s18, 3
      %p191 = pnand %p189, %p190
      %p192 = pneg %p191
      // Predicated region
      $region25: #{tpu_custom_call.1} parent=5 // pred_check
        _
      $region26: #{tpu_custom_call.1} parent=5 // pred_check_branch
        %194 = sbr.rel (%p191) target = $region28
      $region27: #{tpu_custom_call.1} parent=5 // pred_region
        %s195 = ssub.s32 %s18, 1
        %s196 = sand.u32 %s45, 1
        %s197 = scalar_lea.sflag [#allocation5], %s196
        %s198 = sand.u32 %s45, 1
        %s199 = smul.addr %s198, 8
        %s200 = scalar_lea.vmem [#allocation4], %s199
        // Predicated region
        $region29: #{tpu_custom_call.1} parent=27 // pred_check
          %p201 = pneg %p58
        $region30: #{tpu_custom_call.1} parent=27 // pred_check_branch
          %203 = sbr.rel (%p201) target = $region32
        $region31: #{tpu_custom_call.1} parent=27 // pred_region
          %204 = dma.done %s197, 128
        $region32: #{tpu_custom_call.1} parent=27 // pred_fallthru
          _
        %s205 = sand.u32 %s73, 1
        %s206 = scalar_lea.sflag [#allocation8], %s205
        %s207 = sand.u32 %s73, 1
        %s208 = smul.addr %s207, 2
        %s209 = scalar_lea.vmem [#allocation7], %s208
        // Predicated region
        $region33: #{tpu_custom_call.1} parent=27 // pred_check
          %p210 = pneg %p86
        $region34: #{tpu_custom_call.1} parent=27 // pred_check_branch
          %212 = sbr.rel (%p210) target = $region36
        $region35: #{tpu_custom_call.1} parent=27 // pred_region
          %213 = dma.done %s206, 32
        $region36: #{tpu_custom_call.1} parent=27 // pred_fallthru
          _
        %s214 = sand.u32 %s45, 1
        %s215 = scalar_lea.sflag [#allocation5], %s214
        %s216 = sand.u32 %s45, 1
        %s217 = smul.addr %s216, 8
        %s218 = scalar_lea.vmem [#allocation4], %s217
        %p219 = pneg %p58
        %p220 = pneg %p55
        %s221 = sand.u32 %s73, 1
        %s222 = scalar_lea.sflag [#allocation8], %s221
        %s223 = sand.u32 %s73, 1
        %s224 = smul.addr %s223, 2
        %s225 = scalar_lea.vmem [#allocation7], %s224
        %p226 = pneg %p86
        %p227 = pneg %p83
        %p228 = pneg %p107
        %p229 = pneg %p104
        %p230 = pneg %p128
        %p231 = pneg %p125
        %s232 = smul.u32 2, %s28
        %s233 = smul.u32 2, %s28
        %p234 = scmp.eq.s32.totalorder %s27, 0
        %p235 = scmp.eq.s32.totalorder %s28, 0
        %p236 = pnand %p234, %p235
        %p237 = pneg %p236
        // Predicated region
        $region37: #{tpu_custom_call.1} parent=27 // pred_check
          _
        $region38: #{tpu_custom_call.1} parent=27 // pred_check_branch
          %239 = sbr.rel (%p236) target = $region40
        $region39: #{tpu_custom_call.1} parent=27 // pred_region
          %v240 = vlaneseq
          %vm241 = vcmp.ge.s32.totalorder %v240, 0
          %vm242 = vcmp.lt.s32.totalorder %v240, 256
          %vm243 = vmand %vm241, %vm242
          %244 = vst.msk [vmem:[#allocation2] sm:$0x3] %vm243, 0.0
          %245 = vst.msk [vmem:[#allocation3] sm:$0x3] %vm243, 0.0
        $region40: #{tpu_custom_call.1} parent=27 // pred_fallthru
          _
        %v246 = vld [vmem:[%s200] sm:$0xff]
        %v247 = vld [vmem:[%s209] sm:$0x3]
        %v249 = vcombine.high %v246, %v246
        %vm251 = vcmask 1043456
        %v252 = vsel %vm251, %v246, -inf
        %v253 = vrot.slane %v252, 4
        %v254 = vmax.f32 %v252, %v253
        %v255 = vrot.slane %v254, 2
        %v256 = vmax.f32 %v254, %v255
        %v257 = vrot.slane %v256, 1
        %v258 = vmax.f32 %v256, %v257
        %v259 = vsel %vm251, %v249, -inf
        %v260 = vrot.slane %v259, 4
        %v261 = vmax.f32 %v259, %v260
        %v262 = vrot.slane %v261, 2
        %v263 = vmax.f32 %v261, %v262
        %v264 = vrot.slane %v263, 1
        %v265 = vmax.f32 %v263, %v264
        %v268 = vcombine.low %v258, %v265
        %v270 = vsub.f32 %v246, %v268
        %v271 = vmul.f32 %v270, 1.442695
        %v272 = vpow.pop %v271
        %v274 = vcombine.high %v272, %v272
        %v276 = vsel %vm251, %v272, 0.0
        %v277 = vrot.slane %v276, 4
        %v278 = vadd.f32 %v276, %v277
        %v279 = vrot.slane %v278, 2
        %v280 = vadd.f32 %v278, %v279
        %v281 = vrot.slane %v280, 1
        %v282 = vadd.f32 %v280, %v281
        %v283 = vsel %vm251, %v274, 0.0
        %v284 = vrot.slane %v283, 4
        %v285 = vadd.f32 %v283, %v284
        %v286 = vrot.slane %v285, 2
        %v287 = vadd.f32 %v285, %v286
        %v288 = vrot.slane %v287, 1
        %v289 = vadd.f32 %v287, %v288
        %v290 = vlog2.pop %v282
        %v291 = vmul.f32 %v290, 0.6931472
        %v292 = vlog2.pop %v289
        %v293 = vmul.f32 %v292, 0.6931472
        %v294 = vadd.f32 %v291, %v258
        %v295 = vadd.f32 %v293, %v265
        %v296 = vlaneseq
        %v297 = vshrl.u32 %v296, 7
        %v298 = vlaneseq
        %v299 = vshrl.u32 %v298, 7
        %v300 = vsub.s32 0, %v299
        %v301 = vrot.slane %v247, %v300
        %v302 = vlaneseq
        %v303 = vshrl.u32 %v302, 7
        %v304 = vsub.s32 1, %v303
        %v305 = vrot.slane %v247, %v304
        %vm306 = vcmp.eq.s32.totalorder %v297, %v301
        %vm307 = vcmp.eq.s32.totalorder %v297, %v305
        %v308 = vsel %vm306, %v246, 0.0
        %v309 = vsel %vm307, %v249, 0.0
        %v310 = vsel %vm251, %v308, 0.0
        %v311 = vrot.slane %v310, 4
        %v312 = vadd.f32 %v310, %v311
        %v313 = vrot.slane %v312, 2
        %v314 = vadd.f32 %v312, %v313
        %v315 = vrot.slane %v314, 1
        %v316 = vadd.f32 %v314, %v315
        %v317 = vsel %vm251, %v309, 0.0
        %v318 = vrot.slane %v317, 4
        %v319 = vadd.f32 %v317, %v318
        %v320 = vrot.slane %v319, 2
        %v321 = vadd.f32 %v319, %v320
        %v322 = vrot.slane %v321, 1
        %v323 = vadd.f32 %v321, %v322
        %s324 = smul.u32 %s28, 256
        %v325 = vlaneseq
        %v326 = vand.u32 %v325, 127
        %v327 = vadd.s32 %v326, 128
        %v328 = vstv %s324
        %v329 = vadd.s32 %v328, %v326
        %v330 = vadd.s32 %v328, %v327
        %vm331 = vcmp.ne.s32.totalorder %v247, 250
        %vm332 = vcmp.lt.s32.totalorder %v329, 256
        %vm333 = vcmp.lt.s32.totalorder %v330, 256
        %v334 = vsel %vm332, 1, 0
        %v335 = vsel %vm333, 1, 0
        %v336 = vcombine.low %v334, %v335
        %v338 = vunpack.c.l.s4 1966171168
        %v339 = vunpack.c.0.s8 %v338
        %v340 = vlaneseq
        %v341 = vshrl.u32 %v340, 7
        %v342 = vsub.s32 %v339, %v341
        %v343 = vrot.slane %v336, %v342
        %v345 = vunpack.c.l.s4 1966171168
        %v346 = vunpack.c.0.s8 %v345
        %v347 = vlaneseq
        %v348 = vshrl.u32 %v347, 7
        %v349 = vsub.s32 %v346, %v348
        %v350 = vrot.slane %v343, %v349
        %vm351 = vcmp.ne.s32.totalorder %v350, 0
        %vm352 = vmand %vm331, %vm351
        %v353 = vld [vmem:[#allocation2] sm:$0x3]
        %v354 = vsub.f32 %v294, %v316
        %v355 = vsub.f32 %v295, %v323
        %v358 = vcombine.low %v354, %v355
        %v360 = vunpack.c.l.s4 1966171168
        %v361 = vunpack.c.0.s8 %v360
        %v362 = vlaneseq
        %v363 = vshrl.u32 %v362, 7
        %v364 = vsub.s32 %v361, %v363
        %v365 = vrot.slane %v358, %v364
        %v367 = vunpack.c.l.s4 1966171168
        %v368 = vunpack.c.0.s8 %v367
        %v369 = vlaneseq
        %v370 = vshrl.u32 %v369, 7
        %v371 = vsub.s32 %v368, %v370
        %v372 = vrot.slane %v365, %v371
        %v374 = vsel %vm352, %v372, 0.0
        %v375 = vadd.f32 %v353, %v374
        %v376 = vlaneseq
        %vm377 = vcmp.ge.s32.totalorder %v376, 0
        %vm378 = vcmp.lt.s32.totalorder %v376, 256
        %vm379 = vmand %vm377, %vm378
        %380 = vst.msk [vmem:[#allocation2] sm:$0x3] %vm379, %v375
        %v381 = vld [vmem:[#allocation3] sm:$0x3]
        %v382 = vsel %vm352, 1.0, 0.0
        %v383 = vadd.f32 %v381, %v382
        %384 = vst.msk [vmem:[#allocation3] sm:$0x3] %vm379, %v383
        %p385 = scmp.eq.s32.totalorder %s27, 1
        %p386 = pnand %p385, %p235
        %p387 = pneg %p386
        // Predicated region
        $region41: #{tpu_custom_call.1} parent=27 // pred_check
          _
        $region42: #{tpu_custom_call.1} parent=27 // pred_check_branch
          %389 = sbr.rel (%p386) target = $region44
        $region43: #{tpu_custom_call.1} parent=27 // pred_region
          %v390 = vld [vmem:[#allocation2] sm:$0x3]
          %v392 = vlaneseq
          %v393 = vshrl.u32 %v392, 7
          %v394 = vsub.s32 0, %v393
          %v395 = vrot.slane %v390, %v394
          %v396 = vlaneseq
          %v397 = vshrl.u32 %v396, 7
          %v398 = vsub.s32 1, %v397
          %v399 = vrot.slane %v390, %v398
          %vm402 = vcmask 1040384
          %v403 = vsel %vm402, %v395, 0.0
          %v404 = vsel %vm402, %v399, 0.0
          %v405 = vadd.f32 %v403, %v404
          %406 = vadd.xlane.f32.xlu0 %v405
          %v407 = vpop.xlane.xlu0 %406
          %v408 = vrot.slane %v407, 4
          %v409 = vadd.f32 %v407, %v408
          %v410 = vrot.slane %v409, 2
          %v411 = vadd.f32 %v409, %v410
          %v412 = vrot.slane %v411, 1
          %v413 = vadd.f32 %v411, %v412
          %s414 = vtos %v413
          %v415 = vstv %s414
          %vm416 = vcmask 0
          %417 = vst.msk [vmem:[#allocation9] sm:$0x1] %vm416, %v415
          %v418 = vld [vmem:[#allocation3] sm:$0x3]
          %v420 = vlaneseq
          %v421 = vshrl.u32 %v420, 7
          %v422 = vsub.s32 0, %v421
          %v423 = vrot.slane %v418, %v422
          %v424 = vlaneseq
          %v425 = vshrl.u32 %v424, 7
          %v426 = vsub.s32 1, %v425
          %v427 = vrot.slane %v418, %v426
          %v430 = vsel %vm402, %v423, 0.0
          %v431 = vsel %vm402, %v427, 0.0
          %v432 = vadd.f32 %v430, %v431
          %433 = vadd.xlane.f32.xlu0 %v432
          %v434 = vpop.xlane.xlu0 %433
          %v435 = vrot.slane %v434, 4
          %v436 = vadd.f32 %v434, %v435
          %v437 = vrot.slane %v436, 2
          %v438 = vadd.f32 %v436, %v437
          %v439 = vrot.slane %v438, 1
          %v440 = vadd.f32 %v438, %v439
          %s441 = vtos %v440
          %v442 = vstv %s441
          %443 = vst.msk [vmem:[#allocation10] sm:$0x1] %vm416, %v442
        $region44: #{tpu_custom_call.1} parent=27 // pred_fallthru
          _
        // Predicated region
        $region45: #{tpu_custom_call.1} parent=27 // pred_check
          %p444 = pneg %p104
        $region46: #{tpu_custom_call.1} parent=27 // pred_check_branch
          %446 = sbr.rel (%p444) target = $region48
        $region47: #{tpu_custom_call.1} parent=27 // pred_region
          %s448 = ssub.s32 16, 16
          %449 = vsyncadd [#allocation6], %s448
          %s451 = sshll.u32 [#allocation9], 4
          %s452 = int_to_ptr.vmem [resolvable:$true] %s451
          %454 = dma.vmem_to_hbm [thread:$0]  %s452, 16, %s2, [#allocation6]
        $region48: #{tpu_custom_call.1} parent=27 // pred_fallthru
          _
        // Predicated region
        $region49: #{tpu_custom_call.1} parent=27 // pred_check
          %p455 = pneg %p125
        $region50: #{tpu_custom_call.1} parent=27 // pred_check_branch
          %457 = sbr.rel (%p455) target = $region52
        $region51: #{tpu_custom_call.1} parent=27 // pred_region
          %s459 = ssub.s32 16, 16
          %460 = vsyncadd [#allocation11], %s459
          %s462 = sshll.u32 [#allocation10], 4
          %s463 = int_to_ptr.vmem [resolvable:$true] %s462
          %465 = dma.vmem_to_hbm [thread:$0]  %s463, 16, %s3, [#allocation11]
        $region52: #{tpu_custom_call.1} parent=27 // pred_fallthru
          _
        // Predicated region
        $region53: #{tpu_custom_call.1} parent=27 // pred_check
          %p466 = pneg %p104
        $region54: #{tpu_custom_call.1} parent=27 // pred_check_branch
          %468 = sbr.rel (%p466) target = $region56
        $region55: #{tpu_custom_call.1} parent=27 // pred_region
          %469 = dma.done [#allocation6], 16
        $region56: #{tpu_custom_call.1} parent=27 // pred_fallthru
          _
        // Predicated region
        $region57: #{tpu_custom_call.1} parent=27 // pred_check
          %p470 = pneg %p125
        $region58: #{tpu_custom_call.1} parent=27 // pred_check_branch
          %472 = sbr.rel (%p470) target = $region60
        $region59: #{tpu_custom_call.1} parent=27 // pred_region
          %473 = dma.done [#allocation11], 16
        $region60: #{tpu_custom_call.1} parent=27 // pred_fallthru
          _
      $region28: #{tpu_custom_call.1} parent=5 // pred_fallthru
        _
      %p474 = scmp.le.s32.totalorder 2, %s18
      // Predicated region
      $region61: #{tpu_custom_call.1} parent=5 // pred_check
        %p475 = pneg %p474
      $region62: #{tpu_custom_call.1} parent=5 // pred_check_branch
        %477 = sbr.rel (%p475) target = $region64
      $region63: #{tpu_custom_call.1} parent=5 // pred_region
        %s478 = ssub.s32 %s18, 2
      $region64: #{tpu_custom_call.1} parent=5 // pred_fallthru
        _
    $region6: #{tpu_custom_call.1} parent=1 // loop_footer
      %s22 = sadd.s32 1, %s18
    $region7: #{tpu_custom_call.1} parent=1 // loop_footer_branch
      %17 = sbr.rel target = $region3
    $region8: #{tpu_custom_call.1} parent=1 // loop_exit
      _
    %479 = vsyncpa [#allocation5], 1
    %s480 = scalar_lea.sflag [#allocation5], 1
    %481 = vsyncpa %s480, 1
    %482 = vsyncpa [#allocation8], 1
    %s483 = scalar_lea.sflag [#allocation8], 1
    %484 = vsyncpa %s483, 1
    %485 = vsyncpa [#allocation6], 1
    %s486 = scalar_lea.sflag [#allocation6], 1
    %487 = vsyncpa %s486, 1
    %488 = vsyncpa [#allocation11], 1

</llo_original>
